<compile_context>
chip_gen: v7x
topology: tpu7x:2x2x1
jax: 0.10.0
libtpu: 0.0.40
codegen_flags: <defaults>
</compile_context>

<pallas_src>
import functools

import jax
import jax.numpy as jnp
from jax.experimental import pallas as pl
from jax.experimental.pallas import tpu as pltpu


def _resblock_kernel(xg_ref, w_ref, gamma_ref, beta_ref, mask_ref, o_ref, patches_ref,
                     *, n, h, w, wp):
    # xg_ref     : (C, Q + 2*(Wp+1)) f32 — padded activation, channel-major, flattened over
    #                                      (N, Hp, Wp), with zero guard bands on both ends
    # w_ref      : (C, 9C) bf16          — conv weights, columns ordered (ky, kx, ci)
    # gamma_ref  : (C, 1)  f32
    # beta_ref   : (C, 1)  f32
    # mask_ref   : (1, Q)  f32           — 1.0 on interior (non-halo) pixels, 0.0 on halo
    # o_ref      : (C, Q)  f32           — relu(bn(conv)) + x on the padded grid
    # patches_ref: (9C, Q) bf16 scratch  — im2col patches, K on sublanes, pixels on lanes
    C = w_ref.shape[0]
    Q = o_ref.shape[1]
    nhw = n * h * w

    xg = xg_ref[...]                               # (C, Qg) f32
    xg_bf = xg.astype(jnp.bfloat16)                # single narrowing cast before any tap copy

    # im2col: tap (ky, kx) of the 3x3 stencil is the flat padded input shifted by
    # (ky-1)*Wp + (kx-1), i.e. a static lane-slice of the guarded array at offset ky*Wp + kx.
    # Each tap is written straight into the scratch, so only one tap value is live at a time.
    for ky in range(3):
        for kx in range(3):
            t = ky * 3 + kx
            off = ky * wp + kx
            patches_ref[t * C:(t + 1) * C, :] = xg_bf[:, off:off + Q]

    # Single MXU matmul: (C, 9C) x (9C, Q) -> channel-major (C, Q), f32 accumulation.
    conv = jax.lax.dot_general(
        w_ref[...], patches_ref[...],
        dimension_numbers=(((1,), (0,)), ((), ())),
        preferred_element_type=jnp.float32)        # (C, Q)

    # Fused training-mode BatchNorm2d stats over the N*H*W interior pixels only (halo masked),
    # single pass: per-channel sum and sum-of-squares.
    mask = mask_ref[...]                           # (1, Q), broadcasts over channels
    cm = conv * mask
    inv_n = jnp.float32(1.0 / nhw)
    mean = jnp.sum(cm, axis=1, keepdims=True) * inv_n           # (C, 1)
    ex2 = jnp.sum(cm * conv, axis=1, keepdims=True) * inv_n     # (C, 1)
    var = jnp.maximum(ex2 - mean * mean, 0.0)                   # clamp: avoid NaN from cancellation
    scale = gamma_ref[...] * jax.lax.rsqrt(var + 1e-5)          # (C, 1), rsqrt -> EUP slot
    shift = beta_ref[...] - mean * scale                        # (C, 1)

    # Residual: the centre tap of the f32 input is exactly x in (C, Q) layout — no transpose.
    resid = xg[:, wp + 1:wp + 1 + Q]

    # BN affine + ReLU + residual add: one fused, lane-dense tail; lane-dense store.
    o_ref[...] = (jnp.maximum(conv * scale + shift, 0.0) + resid).astype(o_ref.dtype)


def resblock_forward(img_nchw, conv_w_oihw, bn_gamma, bn_beta):
    """img_nchw: (N, C, H, W); conv_w_oihw: (C, C, 3, 3); bn_gamma/bn_beta: (C,)."""
    N, C, H, W = img_nchw.shape
    Hp, Wp = H + 2, W + 2
    Q = N * Hp * Wp            # pixels on the padded grid (the kernel's lane axis)
    G = Wp + 1                 # guard band so every 3x3 tap is an in-bounds static slice

    # Channel-major + spatial halo + flatten + guard band (XLA fuses this into one copy).
    # TODO(synk): for production shapes, fuse the halo pad into the kernel (VMEM scratch halo),
    # tile Q with a ("parallel", "arbitrary") grid sized for v7x's 64 MiB VMEM / 2 TCs with
    # cross-tile (C,1) BN accumulators (pl.when init/finalize), switch to 9 accumulated shifted
    # matmuls for large C, and keep the (C, Q) layout end-to-end across stacked ResBlocks
    # instead of transposing back to NCHW after every block.
    x_c = jnp.transpose(img_nchw, (1, 0, 2, 3)).astype(jnp.float32)     # (C, N, H, W)
    x_p = jnp.pad(x_c, ((0, 0), (0, 0), (1, 1), (1, 1)))                # (C, N, Hp, Wp)
    xg = jnp.pad(x_p.reshape(C, Q), ((0, 0), (G, G)))                   # (C, Q + 2G)

    # (C_out, C_in, 3, 3) -> (C_out, 9*C_in), columns ordered (ky, kx, ci); bf16 for the MXU
    # (f32 accumulation inside the kernel — switch to f32 patches/weights if tighter tolerance
    # vs. torch.float32 is required).
    w_t = (jnp.transpose(conv_w_oihw, (0, 2, 3, 1))
           .reshape(C, 9 * C).astype(jnp.bfloat16))
    gamma = bn_gamma.reshape(C, 1).astype(jnp.float32)
    beta = bn_beta.reshape(C, 1).astype(jnp.float32)

    # Interior-pixel mask on the padded grid (used only for the BN statistics).
    row_ok = (jnp.arange(Hp) >= 1) & (jnp.arange(Hp) <= H)
    col_ok = (jnp.arange(Wp) >= 1) & (jnp.arange(Wp) <= W)
    mask2d = (row_ok[:, None] & col_ok[None, :]).astype(jnp.float32)    # (Hp, Wp)
    mask = jnp.tile(mask2d.reshape(1, Hp * Wp), (1, N))                 # (1, Q)

    kernel = functools.partial(_resblock_kernel, n=N, h=H, w=W, wp=Wp)
    out_flat = pl.pallas_call(
        kernel,
        out_shape=jax.ShapeDtypeStruct((C, Q), jnp.float32),
        in_specs=[pl.BlockSpec(memory_space=pltpu.MemorySpace.VMEM)] * 5,
        out_specs=pl.BlockSpec(memory_space=pltpu.MemorySpace.VMEM),
        scratch_shapes=[pltpu.VMEM((9 * C, Q), jnp.bfloat16)],
    )(xg, w_t, gamma, beta, mask)

    # Crop the halo and return to the PyTorch NCHW layout (single boundary transpose).
    out = out_flat.reshape(C, N, Hp, Wp)[:, :, 1:H + 1, 1:W + 1]
    return jnp.transpose(out, (1, 0, 2, 3))


if __name__ == "__main__":
    key = jax.random.PRNGKey(0)
    N, C, H, W = 2, 4, 16, 16
    k_img, k_w = jax.random.split(key)

    img = jax.random.normal(k_img, (N, C, H, W), dtype=jnp.float32)

    # Deterministic kaiming_normal_(nonlinearity='relu'): std = sqrt(2 / fan_in),
    # fan_in = C * 3 * 3 for a Conv2d weight of shape (C_out, C_in, 3, 3).
    fan_in = C * 3 * 3
    std = (2.0 / fan_in) ** 0.5
    conv_w = jax.random.normal(k_w, (C, C, 3, 3), dtype=jnp.float32) * std

    bn_gamma = jnp.full((C,), 0.5, dtype=jnp.float32)   # constant_(weight, 0.5)
    bn_beta = jnp.zeros((C,), dtype=jnp.float32)        # zeros_(bias)

    out = resblock_forward(img, conv_w, bn_gamma, bn_beta)
    jax.block_until_ready(out)
    assert out.shape == (N, C, H, W)
    print("KERNEL_OK")
</pallas_src>

<mosaic_0001>
module attributes {stable_mosaic.version = 11 : i64} {
  func.func @_resblock_kernel(%arg0: memref<4x686xf32, #tpu.memory_space<vmem>>, %arg1: memref<4x36xbf16, #tpu.memory_space<vmem>>, %arg2: memref<4x1xf32, #tpu.memory_space<vmem>>, %arg3: memref<4x1xf32, #tpu.memory_space<vmem>>, %arg4: memref<1x648xf32, #tpu.memory_space<vmem>>, %arg5: memref<4x648xf32, #tpu.memory_space<vmem>>, %arg6: memref<36x648xbf16, #tpu.memory_space<vmem>>) attributes {dimension_semantics = [], scalar_prefetch = 0 : i64, scratch_operands = 1 : i64, tpu.core_type = #tpu.core_type<tc>} {
    %c0 = arith.constant 0 : index
    %c0_0 = arith.constant 0 : index
    %0 = vector.load %arg0[%c0, %c0_0] : memref<4x686xf32, #tpu.memory_space<vmem>>, vector<4x686xf32>
    %1 = arith.truncf %0 : vector<4x686xf32> to vector<4x686xbf16>
    %2 = vector.extract_strided_slice %1 {offsets = [0, 0], sizes = [4, 648], strides = [1, 1]} : vector<4x686xbf16> to vector<4x648xbf16>
    %c0_1 = arith.constant 0 : index
    %c0_2 = arith.constant 0 : index
    %3 = vector.load %arg6[%c0_1, %c0_2] : memref<36x648xbf16, #tpu.memory_space<vmem>>, vector<4x648xbf16>
    tpu.vector_store %arg6[%c0_1, %c0_2], %2 {strides = array<i32>} : memref<36x648xbf16, #tpu.memory_space<vmem>>, vector<4x648xbf16>,
    %4 = vector.extract_strided_slice %1 {offsets = [0, 1], sizes = [4, 648], strides = [1, 1]} : vector<4x686xbf16> to vector<4x648xbf16>
    %c4 = arith.constant 4 : index
    %c0_3 = arith.constant 0 : index
    %5 = vector.load %arg6[%c4, %c0_3] : memref<36x648xbf16, #tpu.memory_space<vmem>>, vector<4x648xbf16>
    tpu.vector_store %arg6[%c4, %c0_3], %4 {strides = array<i32>} : memref<36x648xbf16, #tpu.memory_space<vmem>>, vector<4x648xbf16>,
    %6 = vector.extract_strided_slice %1 {offsets = [0, 2], sizes = [4, 648], strides = [1, 1]} : vector<4x686xbf16> to vector<4x648xbf16>
    %c8 = arith.constant 8 : index
    %c0_4 = arith.constant 0 : index
    %7 = vector.load %arg6[%c8, %c0_4] : memref<36x648xbf16, #tpu.memory_space<vmem>>, vector<4x648xbf16>
    tpu.vector_store %arg6[%c8, %c0_4], %6 {strides = array<i32>} : memref<36x648xbf16, #tpu.memory_space<vmem>>, vector<4x648xbf16>,
    %8 = vector.extract_strided_slice %1 {offsets = [0, 18], sizes = [4, 648], strides = [1, 1]} : vector<4x686xbf16> to vector<4x648xbf16>
    %c12 = arith.constant 12 : index
    %c0_5 = arith.constant 0 : index
    %9 = vector.load %arg6[%c12, %c0_5] : memref<36x648xbf16, #tpu.memory_space<vmem>>, vector<4x648xbf16>
    tpu.vector_store %arg6[%c12, %c0_5], %8 {strides = array<i32>} : memref<36x648xbf16, #tpu.memory_space<vmem>>, vector<4x648xbf16>,
    %10 = vector.extract_strided_slice %1 {offsets = [0, 19], sizes = [4, 648], strides = [1, 1]} : vector<4x686xbf16> to vector<4x648xbf16>
    %c16 = arith.constant 16 : index
    %c0_6 = arith.constant 0 : index
    %11 = vector.load %arg6[%c16, %c0_6] : memref<36x648xbf16, #tpu.memory_space<vmem>>, vector<4x648xbf16>
    tpu.vector_store %arg6[%c16, %c0_6], %10 {strides = array<i32>} : memref<36x648xbf16, #tpu.memory_space<vmem>>, vector<4x648xbf16>,
    %12 = vector.extract_strided_slice %1 {offsets = [0, 20], sizes = [4, 648], strides = [1, 1]} : vector<4x686xbf16> to vector<4x648xbf16>
    %c20 = arith.constant 20 : index
    %c0_7 = arith.constant 0 : index
    %13 = vector.load %arg6[%c20, %c0_7] : memref<36x648xbf16, #tpu.memory_space<vmem>>, vector<4x648xbf16>
    tpu.vector_store %arg6[%c20, %c0_7], %12 {strides = array<i32>} : memref<36x648xbf16, #tpu.memory_space<vmem>>, vector<4x648xbf16>,
    %14 = vector.extract_strided_slice %1 {offsets = [0, 36], sizes = [4, 648], strides = [1, 1]} : vector<4x686xbf16> to vector<4x648xbf16>
    %c24 = arith.constant 24 : index
    %c0_8 = arith.constant 0 : index
    %15 = vector.load %arg6[%c24, %c0_8] : memref<36x648xbf16, #tpu.memory_space<vmem>>, vector<4x648xbf16>
    tpu.vector_store %arg6[%c24, %c0_8], %14 {strides = array<i32>} : memref<36x648xbf16, #tpu.memory_space<vmem>>, vector<4x648xbf16>,
    %16 = vector.extract_strided_slice %1 {offsets = [0, 37], sizes = [4, 648], strides = [1, 1]} : vector<4x686xbf16> to vector<4x648xbf16>
    %c28 = arith.constant 28 : index
    %c0_9 = arith.constant 0 : index
    %17 = vector.load %arg6[%c28, %c0_9] : memref<36x648xbf16, #tpu.memory_space<vmem>>, vector<4x648xbf16>
    tpu.vector_store %arg6[%c28, %c0_9], %16 {strides = array<i32>} : memref<36x648xbf16, #tpu.memory_space<vmem>>, vector<4x648xbf16>,
    %18 = vector.extract_strided_slice %1 {offsets = [0, 38], sizes = [4, 648], strides = [1, 1]} : vector<4x686xbf16> to vector<4x648xbf16>
    %c32 = arith.constant 32 : index
    %c0_10 = arith.constant 0 : index
    %19 = vector.load %arg6[%c32, %c0_10] : memref<36x648xbf16, #tpu.memory_space<vmem>>, vector<4x648xbf16>
    tpu.vector_store %arg6[%c32, %c0_10], %18 {strides = array<i32>} : memref<36x648xbf16, #tpu.memory_space<vmem>>, vector<4x648xbf16>,
    %c0_11 = arith.constant 0 : index
    %c0_12 = arith.constant 0 : index
    %20 = vector.load %arg1[%c0_11, %c0_12] : memref<4x36xbf16, #tpu.memory_space<vmem>>, vector<4x36xbf16>
    %c0_13 = arith.constant 0 : index
    %c0_14 = arith.constant 0 : index
    %21 = vector.load %arg6[%c0_13, %c0_14] : memref<36x648xbf16, #tpu.memory_space<vmem>>, vector<36x648xbf16>
    %cst = arith.constant dense<0.000000e+00> : vector<4x648xf32>
    %22 = tpu.matmul %20, %21, %cst {dimension_numbers = #tpu.dot_dimension_numbers<[1], [0], [0], [1], [0, 0, 1, 1], [], []>} : vector<4x36xbf16>, vector<36x648xbf16>, vector<4x648xf32> -> vector<4x648xf32>
    %c0_15 = arith.constant 0 : index
    %c0_16 = arith.constant 0 : index
    %23 = vector.load %arg4[%c0_15, %c0_16] : memref<1x648xf32, #tpu.memory_space<vmem>>, vector<1x648xf32>
    %24 = vector.broadcast %23 : vector<1x648xf32> to vector<4x648xf32>
    %25 = arith.mulf %22, %24 : vector<4x648xf32>
    %cst_17 = arith.constant dense<0.000000e+00> : vector<4xf32>
    %26 = vector.multi_reduction <add>, %25, %cst_17 [1] : vector<4x648xf32> to vector<4xf32>
    %27 = vector.shape_cast %26 : vector<4xf32> to vector<4x1xf32>
    %cst_18 = arith.constant 0.001953125 : f32
    %28 = vector.broadcast %cst_18 : f32 to vector<4x1xf32>
    %29 = arith.mulf %27, %28 : vector<4x1xf32>
    %30 = arith.mulf %25, %22 : vector<4x648xf32>
    %cst_19 = arith.constant dense<0.000000e+00> : vector<4xf32>
    %31 = vector.multi_reduction <add>, %30, %cst_19 [1] : vector<4x648xf32> to vector<4xf32>
    %32 = vector.shape_cast %31 : vector<4xf32> to vector<4x1xf32>
    %cst_20 = arith.constant 0.001953125 : f32
    %33 = vector.broadcast %cst_20 : f32 to vector<4x1xf32>
    %34 = arith.mulf %32, %33 : vector<4x1xf32>
    %35 = arith.mulf %29, %29 : vector<4x1xf32>
    %36 = arith.subf %34, %35 : vector<4x1xf32>
    %cst_21 = arith.constant 0.000000e+00 : f32
    %37 = vector.broadcast %cst_21 : f32 to vector<4x1xf32>
    %38 = arith.maximumf %36, %37 : vector<4x1xf32>
    %c0_22 = arith.constant 0 : index
    %c0_23 = arith.constant 0 : index
    %39 = vector.load %arg2[%c0_22, %c0_23] : memref<4x1xf32, #tpu.memory_space<vmem>>, vector<4x1xf32>
    %cst_24 = arith.constant 9.99999974E-6 : f32
    %40 = vector.broadcast %cst_24 : f32 to vector<4x1xf32>
    %41 = arith.addf %38, %40 : vector<4x1xf32>
    %42 = math.rsqrt %41 : vector<4x1xf32>
    %43 = arith.mulf %39, %42 : vector<4x1xf32>
    %c0_25 = arith.constant 0 : index
    %c0_26 = arith.constant 0 : index
    %44 = vector.load %arg3[%c0_25, %c0_26] : memref<4x1xf32, #tpu.memory_space<vmem>>, vector<4x1xf32>
    %45 = arith.mulf %29, %43 : vector<4x1xf32>
    %46 = arith.subf %44, %45 : vector<4x1xf32>
    %47 = vector.extract_strided_slice %0 {offsets = [0, 19], sizes = [4, 648], strides = [1, 1]} : vector<4x686xf32> to vector<4x648xf32>
    %48 = vector.broadcast %43 : vector<4x1xf32> to vector<4x648xf32>
    %49 = arith.mulf %22, %48 : vector<4x648xf32>
    %50 = vector.broadcast %46 : vector<4x1xf32> to vector<4x648xf32>
    %51 = arith.addf %49, %50 : vector<4x648xf32>
    %cst_27 = arith.constant 0.000000e+00 : f32
    %52 = vector.broadcast %cst_27 : f32 to vector<4x648xf32>
    %53 = arith.maximumf %51, %52 : vector<4x648xf32>
    %54 = arith.addf %53, %47 : vector<4x648xf32>
    %c0_28 = arith.constant 0 : index
    %c0_29 = arith.constant 0 : index
    %55 = vector.load %arg5[%c0_28, %c0_29] : memref<4x648xf32, #tpu.memory_space<vmem>>, vector<4x648xf32>
    tpu.vector_store %arg5[%c0_28, %c0_29], %54 {strides = array<i32>} : memref<4x648xf32, #tpu.memory_space<vmem>>, vector<4x648xf32>,
    return
  }
}

</mosaic_0001>

<llo_original>
// kernel: tpu_custom_call.1
$region0: #{tpu_custom_call.1}
  #allocation0 [shape = 'u32[]', space=smem, size = 0x4, offset = 0x4, fixed_abs, tag = 'smem constant byte address 0x4 - core index']
  #allocation1 [shape = 'u32[144,128]{1,0:T(1,128)}', space=vmem, size = 0x12000, scoped, tag = 'internal scratch']
  #allocation2 [shape = 'bf16[36,648]{1,0:T(8,128)(2,1)}', space=vmem, size = 0xf000, scoped, tag = 'scratch operand']
  %s0 = inlined_call_operand.hbm [shape: f32[4,686], index: 0, kind: input, shape index: {}]
  %s1 = inlined_call_operand.vmem [shape: bf16[4,36], index: 1, kind: input, shape index: {}]
  %s2 = inlined_call_operand.vmem [shape: f32[4,1], index: 2, kind: input, shape index: {}]
  %s3 = inlined_call_operand.vmem [shape: f32[4,1], index: 3, kind: input, shape index: {}]
  %s4 = inlined_call_operand.vmem [shape: f32[1,648], index: 4, kind: input, shape index: {}]
  %s5 = inlined_call_operand.hbm [shape: f32[4,648], index: 5, kind: output, shape index: {}]
  %s6 = sld [smem:[#allocation0]]
  $region34: #{tpu_custom_call.1} parent=0
    _
  %s8 = ssub.s32 1, %s6
  %s9 = scalar_select 0, %s8, %s6
  $region1: #{tpu_custom_call.1} parent=0
    #allocation3 [shape = 'u8[12288]{0}', space=vmem, size = 0x3000, scoped, tag = 'input window, operand 0, single buffered']
    #allocation4 [shape = 's32[1]{0}', space=sflag, size = 0x4, scoped, tag = 'scoped memory for tpu_custom_call.1']
    #allocation5 [shape = 's32[1]{0}', space=sflag, size = 0x4, scoped, tag = 'scoped memory for tpu_custom_call.1']
    #allocation6 [shape = 'u8[12288]{0}', space=vmem, size = 0x3000, scoped, tag = 'output window, operand 0, single buffered']
    %10 = vsyncpa [#allocation4], 0
    %11 = vsyncpa [#allocation5], 0
    // Predicated region
    $region2: #{tpu_custom_call.1} parent=1 // pred_check
      _
    $region3: #{tpu_custom_call.1} parent=1 // pred_check_branch
      %13 = sbr.rel (0) target = $region5
    $region4: #{tpu_custom_call.1} parent=1 // pred_region
      %s15 = ssub.s32 384, 384
      %16 = vsyncadd [#allocation4], %s15
      %s18 = sshll.u32 [#allocation3], 4
      %s19 = int_to_ptr.vmem [resolvable:$true] %s18
      %21 = dma.hbm_to_vmem [thread:$0]  %s0, 384, %s19, [#allocation4]
    $region5: #{tpu_custom_call.1} parent=1 // pred_fallthru
      _
    // Predicated region
    $region6: #{tpu_custom_call.1} parent=1 // pred_check
      _
    $region7: #{tpu_custom_call.1} parent=1 // pred_check_branch
      %23 = sbr.rel (0) target = $region9
    $region8: #{tpu_custom_call.1} parent=1 // pred_region
      _
    $region9: #{tpu_custom_call.1} parent=1 // pred_fallthru
      _
    // Predicated region
    $region10: #{tpu_custom_call.1} parent=1 // pred_check
      _
    $region11: #{tpu_custom_call.1} parent=1 // pred_check_branch
      %25 = sbr.rel (0) target = $region13
    $region12: #{tpu_custom_call.1} parent=1 // pred_region
      _
    $region13: #{tpu_custom_call.1} parent=1 // pred_fallthru
      _
    // Predicated region
    $region14: #{tpu_custom_call.1} parent=1 // pred_check
      _
    $region15: #{tpu_custom_call.1} parent=1 // pred_check_branch
      %27 = sbr.rel (0) target = $region17
    $region16: #{tpu_custom_call.1} parent=1 // pred_region
      _
    $region17: #{tpu_custom_call.1} parent=1 // pred_fallthru
      _
    // Predicated region
    $region18: #{tpu_custom_call.1} parent=1 // pred_check
      _
    $region19: #{tpu_custom_call.1} parent=1 // pred_check_branch
      %29 = sbr.rel (0) target = $region21
    $region20: #{tpu_custom_call.1} parent=1 // pred_region
      _
    $region21: #{tpu_custom_call.1} parent=1 // pred_fallthru
      _
    // Predicated region
    $region22: #{tpu_custom_call.1} parent=1 // pred_check
      _
    $region23: #{tpu_custom_call.1} parent=1 // pred_check_branch
      %31 = sbr.rel (0) target = $region25
    $region24: #{tpu_custom_call.1} parent=1 // pred_region
      %32 = dma.done [#allocation4], 384
    $region25: #{tpu_custom_call.1} parent=1 // pred_fallthru
      _
    %v34 = vld [vmem:[#allocation3] sm:$0xff]
    %v35 = vld [vmem:[#allocation3 + $0x8] sm:$0xff]
    %v36 = vld [vmem:[#allocation3 + $0x10] sm:$0xff]
    %v40 = vcombine.high %v34, %v34
    %v41 = vcombine.high %v35, %v35
    %v42 = vcombine.high %v36, %v36
    %v46 = vpack.c.bf16 %v34, %v34
    %v47 = vpack.c.bf16 %v40, %v40
    %v48 = vpack.c.bf16 %v35, %v35
    %v49 = vpack.c.bf16 %v41, %v41
    %v50 = vpack.c.bf16 %v36, %v36
    %v51 = vpack.c.bf16 %v42, %v42
    %v58 = vunpack.c.l.b16 %v46
    %v59 = vunpack.c.l.b16 %v47
    %v60 = vunpack.c.l.b16 %v48
    %v61 = vunpack.c.l.b16 %v49
    %v62 = vunpack.c.l.b16 %v50
    %v63 = vunpack.c.l.b16 %v51
    %v64 = vpack.c.b16 %v59, %v58
    %v65 = vpack.c.b16 %v61, %v60
    %v66 = vpack.c.b16 %v63, %v62
    %70 = vst [vmem:[#allocation2] sm:$0x33] %v64
    %71 = vst [vmem:[#allocation2 + $0x8] sm:$0x33] %v65
    %vm72 = vcmask 1041408
    %vm73 = vcmask 62468
    %vm74 = vmor %vm73, %vm72
    %75 = vst.msk [vmem:[#allocation2 + $0x10] sm:$0x33] %vm74, %v66
    %v76 = vrot.slane %v64, 6
    %v77 = vrot.slane %v65, 6
    %v78 = vrot.slane %v66, 6
    %79 = vrot.lane.b32.xlu0 %v76, 127
    %v80 = vpop.permute.xlu0 %79
    %81 = vrot.lane.b32.xlu0 %v77, 127
    %v82 = vpop.permute.xlu0 %81
    %83 = vrot.lane.b32.xlu0 %v78, 127
    %v84 = vpop.permute.xlu0 %83
    %v85 = vrot.slane %v80, 4
    %v86 = vrot.slane %v82, 4
    %v87 = vrot.slane %v84, 4
    %vm88 = vcmask 1043456
    %v89 = vsel %vm88, %v85, %v86
    %vm90 = vcmask 1039360
    %v91 = vsel %vm90, %v80, %v89
    %v92 = vsel %vm88, %v86, %v87
    %v93 = vsel %vm90, %v82, %v92
    %v94 = vsel %vm90, %v84, %v87
    %98 = vst [vmem:[#allocation2] sm:$0xcc] %v91
    %99 = vst [vmem:[#allocation2 + $0x8] sm:$0xcc] %v93
    %vm100 = vcmask 1043458
    %vm101 = vcmask 64518
    %vm102 = vmor %vm101, %vm100
    %103 = vst.msk [vmem:[#allocation2 + $0x10] sm:$0xcc] %vm102, %v94
    %104 = vrot.lane.b32.xlu0 %v64, 126
    %v105 = vpop.permute.xlu0 %104
    %106 = vrot.lane.b32.xlu0 %v65, 126
    %v107 = vpop.permute.xlu0 %106
    %108 = vrot.lane.b32.xlu0 %v66, 126
    %v109 = vpop.permute.xlu0 %108
    %v110 = vrot.slane %v105, 4
    %v111 = vrot.slane %v107, 4
    %v112 = vrot.slane %v109, 4
    %v113 = vsel %vm88, %v110, %v111
    %vm114 = vcmask 1031168
    %v115 = vsel %vm114, %v105, %v113
    %v116 = vsel %vm88, %v111, %v112
    %v117 = vsel %vm114, %v107, %v116
    %v118 = vsel %vm114, %v109, %v112
    %122 = vst [vmem:[#allocation2 + $0x18] sm:$0x33] %v115
    %123 = vst [vmem:[#allocation2 + $0x20] sm:$0x33] %v117
    %124 = vst.msk [vmem:[#allocation2 + $0x28] sm:$0x33] %vm74, %v118
    %125 = vrot.lane.b32.xlu0 %v76, 110
    %v126 = vpop.permute.xlu0 %125
    %127 = vrot.lane.b32.xlu0 %v77, 110
    %v128 = vpop.permute.xlu0 %127
    %129 = vrot.lane.b32.xlu0 %v78, 110
    %v130 = vpop.permute.xlu0 %129
    %v131 = vrot.slane %v126, 4
    %v132 = vrot.slane %v128, 4
    %v133 = vrot.slane %v130, 4
    %v134 = vsel %vm88, %v131, %v132
    %vm135 = vcmask 900096
    %v136 = vsel %vm135, %v126, %v134
    %v137 = vsel %vm88, %v132, %v133
    %v138 = vsel %vm135, %v128, %v137
    %v139 = vsel %vm135, %v130, %v133
    %143 = vst [vmem:[#allocation2 + $0x18] sm:$0xcc] %v136
    %144 = vst [vmem:[#allocation2 + $0x20] sm:$0xcc] %v138
    %145 = vst.msk [vmem:[#allocation2 + $0x28] sm:$0xcc] %vm102, %v139
    %146 = vrot.lane.b32.xlu0 %v64, 109
    %v147 = vpop.permute.xlu0 %146
    %148 = vrot.lane.b32.xlu0 %v65, 109
    %v149 = vpop.permute.xlu0 %148
    %150 = vrot.lane.b32.xlu0 %v66, 109
    %v151 = vpop.permute.xlu0 %150
    %v152 = vrot.slane %v147, 4
    %v153 = vrot.slane %v149, 4
    %v154 = vrot.slane %v151, 4
    %v155 = vsel %vm88, %v152, %v153
    %vm156 = vcmask 891904
    %v157 = vsel %vm156, %v147, %v155
    %v158 = vsel %vm88, %v153, %v154
    %v159 = vsel %vm156, %v149, %v158
    %v160 = vsel %vm156, %v151, %v154
    %164 = vst [vmem:[#allocation2 + $0x30] sm:$0x33] %v157
    %165 = vst [vmem:[#allocation2 + $0x38] sm:$0x33] %v159
    %166 = vst.msk [vmem:[#allocation2 + $0x40] sm:$0x33] %vm74, %v160
    %167 = vrot.lane.b32.xlu0 %v76, 108
    %v168 = vpop.permute.xlu0 %167
    %169 = vrot.lane.b32.xlu0 %v77, 108
    %v170 = vpop.permute.xlu0 %169
    %171 = vrot.lane.b32.xlu0 %v78, 108
    %v172 = vpop.permute.xlu0 %171
    %v173 = vrot.slane %v168, 4
    %v174 = vrot.slane %v170, 4
    %v175 = vrot.slane %v172, 4
    %v176 = vsel %vm88, %v173, %v174
    %vm177 = vcmask 883712
    %v178 = vsel %vm177, %v168, %v176
    %v179 = vsel %vm88, %v174, %v175
    %v180 = vsel %vm177, %v170, %v179
    %v181 = vsel %vm177, %v172, %v175
    %185 = vst [vmem:[#allocation2 + $0x30] sm:$0xcc] %v178
    %186 = vst [vmem:[#allocation2 + $0x38] sm:$0xcc] %v180
    %187 = vst.msk [vmem:[#allocation2 + $0x40] sm:$0xcc] %vm102, %v181
    %188 = vrot.lane.b32.xlu0 %v64, 92
    %v189 = vpop.permute.xlu0 %188
    %190 = vrot.lane.b32.xlu0 %v65, 92
    %v191 = vpop.permute.xlu0 %190
    %192 = vrot.lane.b32.xlu0 %v66, 92
    %v193 = vpop.permute.xlu0 %192
    %v194 = vrot.slane %v189, 4
    %v195 = vrot.slane %v191, 4
    %v196 = vrot.slane %v193, 4
    %v197 = vsel %vm88, %v194, %v195
    %vm198 = vcmask 752640
    %v199 = vsel %vm198, %v189, %v197
    %v200 = vsel %vm88, %v195, %v196
    %v201 = vsel %vm198, %v191, %v200
    %v202 = vsel %vm198, %v193, %v196
    %206 = vst [vmem:[#allocation2 + $0x48] sm:$0x33] %v199
    %207 = vst [vmem:[#allocation2 + $0x50] sm:$0x33] %v201
    %208 = vst.msk [vmem:[#allocation2 + $0x58] sm:$0x33] %vm74, %v202
    %209 = vrot.lane.b32.xlu0 %v76, 91
    %v210 = vpop.permute.xlu0 %209
    %211 = vrot.lane.b32.xlu0 %v77, 91
    %v212 = vpop.permute.xlu0 %211
    %213 = vrot.lane.b32.xlu0 %v78, 91
    %v214 = vpop.permute.xlu0 %213
    %v215 = vrot.slane %v210, 4
    %v216 = vrot.slane %v212, 4
    %v217 = vrot.slane %v214, 4
    %v218 = vsel %vm88, %v215, %v216
    %vm219 = vcmask 744448
    %v220 = vsel %vm219, %v210, %v218
    %v221 = vsel %vm88, %v216, %v217
    %v222 = vsel %vm219, %v212, %v221
    %v223 = vsel %vm219, %v214, %v217
    %227 = vst [vmem:[#allocation2 + $0x48] sm:$0xcc] %v220
    %228 = vst [vmem:[#allocation2 + $0x50] sm:$0xcc] %v222
    %229 = vst.msk [vmem:[#allocation2 + $0x58] sm:$0xcc] %vm102, %v223
    %230 = vrot.lane.b32.xlu0 %v64, 90
    %v231 = vpop.permute.xlu0 %230
    %232 = vrot.lane.b32.xlu0 %v65, 90
    %v233 = vpop.permute.xlu0 %232
    %234 = vrot.lane.b32.xlu0 %v66, 90
    %v235 = vpop.permute.xlu0 %234
    %v236 = vrot.slane %v231, 4
    %v237 = vrot.slane %v233, 4
    %v238 = vrot.slane %v235, 4
    %v239 = vsel %vm88, %v236, %v237
    %vm240 = vcmask 736256
    %v241 = vsel %vm240, %v231, %v239
    %v242 = vsel %vm88, %v237, %v238
    %v243 = vsel %vm240, %v233, %v242
    %v244 = vsel %vm240, %v235, %v238
    %248 = vst [vmem:[#allocation2 + $0x60] sm:$0x33] %v241
    %249 = vst [vmem:[#allocation2 + $0x68] sm:$0x33] %v243
    %250 = vst.msk [vmem:[#allocation2 + $0x70] sm:$0x33] %vm74, %v244
    %v251 = vld [vmem:[%s1] sm:$0x3]
    %v252 = vld [vmem:[#allocation2] sm:$0xff]
    %v253 = vld [vmem:[#allocation2 + $0x8] sm:$0xff]
    %v254 = vld [vmem:[#allocation2 + $0x10] sm:$0xff]
    %v255 = vld [vmem:[#allocation2 + $0x18] sm:$0xff]
    %v256 = vld [vmem:[#allocation2 + $0x20] sm:$0xff]
    %v257 = vld [vmem:[#allocation2 + $0x28] sm:$0xff]
    %v258 = vld [vmem:[#allocation2 + $0x30] sm:$0xff]
    %v259 = vld [vmem:[#allocation2 + $0x38] sm:$0xff]
    %v260 = vld [vmem:[#allocation2 + $0x40] sm:$0xff]
    %v261 = vld [vmem:[#allocation2 + $0x48] sm:$0xff]
    %v262 = vld [vmem:[#allocation2 + $0x50] sm:$0xff]
    %v263 = vld [vmem:[#allocation2 + $0x58] sm:$0xff]
    %v264 = vld [vmem:[#allocation2 + $0x60] sm:$0x33]
    %v265 = vld [vmem:[#allocation2 + $0x68] sm:$0x33]
    %v266 = vld [vmem:[#allocation2 + $0x70] sm:$0x33]
    %v282 = vunpack.c.l.b16 %v252
    %v283 = vunpack.c.h.b16 %v252
    %v284 = vunpack.c.l.b16 %v253
    %v285 = vunpack.c.h.b16 %v253
    %v286 = vunpack.c.l.b16 %v254
    %v287 = vunpack.c.h.b16 %v254
    %v288 = vunpack.c.l.b16 %v255
    %v289 = vunpack.c.h.b16 %v255
    %v290 = vunpack.c.l.b16 %v256
    %v291 = vunpack.c.h.b16 %v256
    %v292 = vunpack.c.l.b16 %v257
    %v293 = vunpack.c.h.b16 %v257
    %v294 = vunpack.c.l.b16 %v258
    %v295 = vunpack.c.h.b16 %v258
    %v296 = vunpack.c.l.b16 %v259
    %v297 = vunpack.c.h.b16 %v259
    %v298 = vunpack.c.l.b16 %v260
    %v299 = vunpack.c.h.b16 %v260
    %v300 = vunpack.c.l.b16 %v261
    %v301 = vunpack.c.h.b16 %v261
    %v302 = vunpack.c.l.b16 %v262
    %v303 = vunpack.c.h.b16 %v262
    %v304 = vunpack.c.l.b16 %v263
    %v305 = vunpack.c.h.b16 %v263
    %v306 = vunpack.c.l.b16 %v264
    %v307 = vunpack.c.h.b16 %v264
    %v308 = vunpack.c.l.b16 %v265
    %v309 = vunpack.c.h.b16 %v265
    %v310 = vunpack.c.l.b16 %v266
    %v311 = vunpack.c.h.b16 %v266
    %v312 = vpack.c.b16 %v288, %v282
    %v313 = vpack.c.b16 %v289, %v283
    %v314 = vpack.c.b16 %v290, %v284
    %v315 = vpack.c.b16 %v291, %v285
    %v316 = vpack.c.b16 %v292, %v286
    %v317 = vpack.c.b16 %v293, %v287
    %v318 = vpack.c.b16 %v300, %v294
    %v319 = vpack.c.b16 %v301, %v295
    %v320 = vpack.c.b16 %v302, %v296
    %v321 = vpack.c.b16 %v303, %v297
    %v322 = vpack.c.b16 %v304, %v298
    %v323 = vpack.c.b16 %v305, %v299
    %v324 = vpack.c.b16 %v306, %v306
    %v325 = vpack.c.b16 %v307, %v307
    %v326 = vpack.c.b16 %v308, %v308
    %v327 = vpack.c.b16 %v309, %v309
    %v328 = vpack.c.b16 %v310, %v310
    %v329 = vpack.c.b16 %v311, %v311
    %vm342 = vcmask 293888
    %v344 = vsel %vm342, %v251, 0
    %v347 = vsel %vm72, %v324, 0
    %v350 = vsel %vm72, %v325, 0
    %v353 = vsel %vm72, %v326, 0
    %v356 = vsel %vm72, %v327, 0
    %v359 = vsel %vm72, %v328, 0
    %v362 = vsel %vm72, %v329, 0
    %364 = vmatprep.subr.bf16.mxu0 %v313
    %365 = vmatpush1.bf16.msra.mxu0 %v312
    %366 = vmatprep.subr.bf16.mxu0 %v319
    %367 = vmatpush1.bf16.msra.mxu0 %v318
    %368 = vmatprep.subr.bf16.mxu0 %v350
    %369 = vmatpush1.bf16.msra.mxu0 %v347
    %370 = vmatprep.subr.bf16.mxu0 0
    %371 = vmatpush1.bf16.msra.mxu0 0
    %372 = vmatprep.subr.bf16.mxu0 0
    %373 = vmatpush1.bf16.msra.mxu0 0
    %374 = vmatprep.subr.bf16.mxu0 0
    %375 = vmatpush1.bf16.msra.mxu0 0
    %376 = vmatprep.subr.bf16.mxu0 0
    %377 = vmatpush1.bf16.msra.mxu0 0
    %378 = vmatprep.subr.bf16.mxu0 0
    %379 = vmatpush1.bf16.msra.mxu0 0
    %380 = vmatprep.subr.bf16.mxu0 0
    %381 = vmatpush1.bf16.msra.mxu0 0
    %382 = vmatprep.subr.bf16.mxu0 0
    %383 = vmatpush1.bf16.msra.mxu0 0
    %384 = vmatprep.subr.bf16.mxu0 0
    %385 = vmatpush1.bf16.msra.mxu0 0
    %386 = vmatprep.subr.bf16.mxu0 0
    %387 = vmatpush1.bf16.msra.mxu0 0
    %388 = vmatprep.subr.bf16.mxu0 0
    %389 = vmatpush1.bf16.msra.mxu0 0
    %390 = vmatprep.subr.bf16.mxu0 0
    %391 = vmatpush1.bf16.msra.mxu0 0
    %392 = vmatprep.subr.bf16.mxu0 0
    %393 = vmatpush1.bf16.msra.mxu0 0
    %394 = vmatprep.subr.bf16.mxu0 0
    %395 = vmatpush1.bf16.msra.mxu0 0
    %396 = vmatprep.mubr.bf16.mxu0 0
    %397 = vmatmul.mubr.bf16.gmra.mrb[0].mxu0 %v344
    %v398 = vpop.f32.mrb[0].mxu0
    %v399 = vadd.f32 0.0, %v398
    %v400 = vpop.f32.mrb[0].mxu0
    %v401 = vadd.f32 0.0, %v400
    %v402 = vpop.f32.mrb[0].mxu0
    %v403 = vpop.f32.mrb[0].mxu0
    %404 = vdwg.mxu0
    %405 = vmatprep.subr.bf16.mxu0 %v315
    %406 = vmatpush1.bf16.msra.mxu0 %v314
    %407 = vmatprep.subr.bf16.mxu0 %v321
    %408 = vmatpush1.bf16.msra.mxu0 %v320
    %409 = vmatprep.subr.bf16.mxu0 %v356
    %410 = vmatpush1.bf16.msra.mxu0 %v353
    %411 = vmatprep.subr.bf16.mxu0 0
    %412 = vmatpush1.bf16.msra.mxu0 0
    %413 = vmatprep.subr.bf16.mxu0 0
    %414 = vmatpush1.bf16.msra.mxu0 0
    %415 = vmatprep.subr.bf16.mxu0 0
    %416 = vmatpush1.bf16.msra.mxu0 0
    %417 = vmatprep.subr.bf16.mxu0 0
    %418 = vmatpush1.bf16.msra.mxu0 0
    %419 = vmatprep.subr.bf16.mxu0 0
    %420 = vmatpush1.bf16.msra.mxu0 0
    %421 = vmatprep.subr.bf16.mxu0 0
    %422 = vmatpush1.bf16.msra.mxu0 0
    %423 = vmatprep.subr.bf16.mxu0 0
    %424 = vmatpush1.bf16.msra.mxu0 0
    %425 = vmatprep.subr.bf16.mxu0 0
    %426 = vmatpush1.bf16.msra.mxu0 0
    %427 = vmatprep.subr.bf16.mxu0 0
    %428 = vmatpush1.bf16.msra.mxu0 0
    %429 = vmatprep.subr.bf16.mxu0 0
    %430 = vmatpush1.bf16.msra.mxu0 0
    %431 = vmatprep.subr.bf16.mxu0 0
    %432 = vmatpush1.bf16.msra.mxu0 0
    %433 = vmatprep.subr.bf16.mxu0 0
    %434 = vmatpush1.bf16.msra.mxu0 0
    %435 = vmatprep.subr.bf16.mxu0 0
    %436 = vmatpush1.bf16.msra.mxu0 0
    %437 = vmatprep.mubr.bf16.mxu0 0
    %438 = vmatmul.mubr.bf16.gmra.mrb[0].mxu0 %v344
    %v439 = vpop.f32.mrb[0].mxu0
    %v440 = vadd.f32 0.0, %v439
    %v441 = vpop.f32.mrb[0].mxu0
    %v442 = vadd.f32 0.0, %v441
    %v443 = vpop.f32.mrb[0].mxu0
    %v444 = vpop.f32.mrb[0].mxu0
    %445 = vdwg.mxu0
    %446 = vmatprep.subr.bf16.mxu0 %v317
    %447 = vmatpush1.bf16.msra.mxu0 %v316
    %448 = vmatprep.subr.bf16.mxu0 %v323
    %449 = vmatpush1.bf16.msra.mxu0 %v322
    %450 = vmatprep.subr.bf16.mxu0 %v362
    %451 = vmatpush1.bf16.msra.mxu0 %v359
    %452 = vmatprep.subr.bf16.mxu0 0
    %453 = vmatpush1.bf16.msra.mxu0 0
    %454 = vmatprep.subr.bf16.mxu0 0
    %455 = vmatpush1.bf16.msra.mxu0 0
    %456 = vmatprep.subr.bf16.mxu0 0
    %457 = vmatpush1.bf16.msra.mxu0 0
    %458 = vmatprep.subr.bf16.mxu0 0
    %459 = vmatpush1.bf16.msra.mxu0 0
    %460 = vmatprep.subr.bf16.mxu0 0
    %461 = vmatpush1.bf16.msra.mxu0 0
    %462 = vmatprep.subr.bf16.mxu0 0
    %463 = vmatpush1.bf16.msra.mxu0 0
    %464 = vmatprep.subr.bf16.mxu0 0
    %465 = vmatpush1.bf16.msra.mxu0 0
    %466 = vmatprep.subr.bf16.mxu0 0
    %467 = vmatpush1.bf16.msra.mxu0 0
    %468 = vmatprep.subr.bf16.mxu0 0
    %469 = vmatpush1.bf16.msra.mxu0 0
    %470 = vmatprep.subr.bf16.mxu0 0
    %471 = vmatpush1.bf16.msra.mxu0 0
    %472 = vmatprep.subr.bf16.mxu0 0
    %473 = vmatpush1.bf16.msra.mxu0 0
    %474 = vmatprep.subr.bf16.mxu0 0
    %475 = vmatpush1.bf16.msra.mxu0 0
    %476 = vmatprep.subr.bf16.mxu0 0
    %477 = vmatpush1.bf16.msra.mxu0 0
    %478 = vmatprep.mubr.bf16.mxu0 0
    %479 = vmatmul.mubr.bf16.gmra.mrb[0].mxu0 %v344
    %v480 = vpop.f32.mrb[0].mxu0
    %v481 = vadd.f32 0.0, %v480
    %v482 = vpop.f32.mrb[0].mxu0
    %v483 = vadd.f32 0.0, %v482
    %v484 = vpop.f32.mrb[0].mxu0
    %v485 = vpop.f32.mrb[0].mxu0
    %486 = vdwg.mxu0
    %v487 = vld [vmem:[%s4] sm:$0x3f]
    %v489 = vlaneseq
    %v490 = vshrl.u32 %v489, 7
    %v491 = vsub.s32 0, %v490
    %v492 = vrot.slane %v487, %v491
    %v493 = vlaneseq
    %v494 = vshrl.u32 %v493, 7
    %v495 = vsub.s32 1, %v494
    %v496 = vrot.slane %v487, %v495
    %v497 = vlaneseq
    %v498 = vshrl.u32 %v497, 7
    %v499 = vsub.s32 2, %v498
    %v500 = vrot.slane %v487, %v499
    %v501 = vlaneseq
    %v502 = vshrl.u32 %v501, 7
    %v503 = vsub.s32 3, %v502
    %v504 = vrot.slane %v487, %v503
    %v505 = vlaneseq
    %v506 = vshrl.u32 %v505, 7
    %v507 = vsub.s32 4, %v506
    %v508 = vrot.slane %v487, %v507
    %v509 = vlaneseq
    %v510 = vshrl.u32 %v509, 7
    %v511 = vsub.s32 5, %v510
    %v512 = vrot.slane %v487, %v511
    %v519 = vmul.f32 %v399, %v492
    %v520 = vmul.f32 %v401, %v496
    %v521 = vmul.f32 %v440, %v500
    %v522 = vmul.f32 %v442, %v504
    %v523 = vmul.f32 %v481, %v508
    %v524 = vmul.f32 %v483, %v512
    %vm525 = vcmask 1043456
    %v526 = vsel %vm525, %v519, 0.0
    %v527 = vsel %vm525, %v520, 0.0
    %v528 = vadd.f32 %v526, %v527
    %v529 = vsel %vm525, %v521, 0.0
    %v530 = vadd.f32 %v528, %v529
    %v531 = vsel %vm525, %v522, 0.0
    %v532 = vadd.f32 %v530, %v531
    %v533 = vsel %vm525, %v523, 0.0
    %v534 = vadd.f32 %v532, %v533
    %vm535 = vcmask 60416
    %v536 = vsel %vm535, %v524, 0.0
    %v537 = vadd.f32 %v534, %v536
    %538 = vadd.xlane.f32.xlu0 %v537
    %v539 = vpop.xlane.xlu0 %538
    %v540 = vmul.f32 %v539, 0.001953125
    %v541 = vmul.f32 %v519, %v399
    %v542 = vmul.f32 %v520, %v401
    %v543 = vmul.f32 %v521, %v440
    %v544 = vmul.f32 %v522, %v442
    %v545 = vmul.f32 %v523, %v481
    %v546 = vmul.f32 %v524, %v483
    %v547 = vsel %vm525, %v541, 0.0
    %v548 = vsel %vm525, %v542, 0.0
    %v549 = vadd.f32 %v547, %v548
    %v550 = vsel %vm525, %v543, 0.0
    %v551 = vadd.f32 %v549, %v550
    %v552 = vsel %vm525, %v544, 0.0
    %v553 = vadd.f32 %v551, %v552
    %v554 = vsel %vm525, %v545, 0.0
    %v555 = vadd.f32 %v553, %v554
    %v556 = vsel %vm535, %v546, 0.0
    %v557 = vadd.f32 %v555, %v556
    %558 = vadd.xlane.f32.xlu0 %v557
    %v559 = vpop.xlane.xlu0 %558
    %v560 = vmul.f32 %v559, 0.001953125
    %v561 = vmul.f32 %v540, %v540
    %v562 = vsub.f32 %v560, %v561
    %v563 = vmax.f32 %v562, 0.0
    %v564 = vld [vmem:[%s2] sm:$0xf]
    %v565 = vadd.f32 %v563, 1e-05
    %v566 = vrsqrt.pop %v565
    %v567 = vmul.f32 %v564, %v566
    %v568 = vld [vmem:[%s3] sm:$0xf]
    %v569 = vmul.f32 %v540, %v567
    %v570 = vsub.f32 %v568, %v569
    %572 = vset.pattern.permute.xlu0 0
    %573 = vperm.xlu0 %572, %v567
    %v574 = vpop.permute.xlu0 %573
    %v576 = vmul.f32 %v399, %v574
    %v577 = vmul.f32 %v401, %v574
    %v578 = vmul.f32 %v440, %v574
    %v579 = vmul.f32 %v442, %v574
    %v580 = vmul.f32 %v481, %v574
    %v581 = vmul.f32 %v483, %v574
    %583 = vset.pattern.permute.xlu0 0
    %584 = vperm.xlu0 %583, %v570
    %v585 = vpop.permute.xlu0 %584
    %v587 = vadd.f32 %v576, %v585
    %v588 = vadd.f32 %v577, %v585
    %v589 = vadd.f32 %v578, %v585
    %v590 = vadd.f32 %v579, %v585
    %v591 = vadd.f32 %v580, %v585
    %v592 = vadd.f32 %v581, %v585
    %v593 = vmax.f32 %v587, 0.0
    %v594 = vmax.f32 %v588, 0.0
    %v595 = vmax.f32 %v589, 0.0
    %v596 = vmax.f32 %v590, 0.0
    %v597 = vmax.f32 %v591, 0.0
    %v598 = vmax.f32 %v592, 0.0
    %599 = vrot.lane.b32.xlu0 %v34, 109
    %v600 = vpop.permute.xlu0 %599
    %601 = vrot.lane.b32.xlu0 %v40, 109
    %v602 = vpop.permute.xlu0 %601
    %603 = vrot.lane.b32.xlu0 %v35, 109
    %v604 = vpop.permute.xlu0 %603
    %605 = vrot.lane.b32.xlu0 %v41, 109
    %v606 = vpop.permute.xlu0 %605
    %607 = vrot.lane.b32.xlu0 %v36, 109
    %v608 = vpop.permute.xlu0 %607
    %609 = vrot.lane.b32.xlu0 %v42, 109
    %v610 = vpop.permute.xlu0 %609
    %vm611 = vcmask 891904
    %v612 = vsel %vm611, %v600, %v602
    %v613 = vsel %vm611, %v602, %v604
    %v614 = vsel %vm611, %v604, %v606
    %v615 = vsel %vm611, %v606, %v608
    %v616 = vsel %vm611, %v608, %v610
    %v623 = vadd.f32 %v593, %v612
    %v624 = vadd.f32 %v594, %v613
    %v625 = vadd.f32 %v595, %v614
    %v626 = vadd.f32 %v596, %v615
    %v627 = vadd.f32 %v597, %v616
    %v628 = vadd.f32 %v598, %v610
    %v635 = vcombine.low %v623, %v624
    %v636 = vcombine.low %v625, %v626
    %v637 = vcombine.low %v627, %v628
    %641 = vst [vmem:[#allocation6] sm:$0xff] %v635
    %642 = vst [vmem:[#allocation6 + $0x8] sm:$0xff] %v636
    %vm643 = vcmask 64516
    %vm644 = vmor %vm643, %vm525
    %645 = vst.msk [vmem:[#allocation6 + $0x10] sm:$0xff] %vm644, %v637
    // Predicated region
    $region26: #{tpu_custom_call.1} parent=1 // pred_check
      _
    $region27: #{tpu_custom_call.1} parent=1 // pred_check_branch
      %647 = sbr.rel (0) target = $region29
    $region28: #{tpu_custom_call.1} parent=1 // pred_region
      %s649 = ssub.s32 384, 384
      %650 = vsyncadd [#allocation5], %s649
      %s652 = sshll.u32 [#allocation6], 4
      %s653 = int_to_ptr.vmem [resolvable:$true] %s652
      %655 = dma.vmem_to_hbm [thread:$0]  %s653, 384, %s5, [#allocation5]
    $region29: #{tpu_custom_call.1} parent=1 // pred_fallthru
      _
    // Predicated region
    $region30: #{tpu_custom_call.1} parent=1 // pred_check
      _
    $region31: #{tpu_custom_call.1} parent=1 // pred_check_branch
      %657 = sbr.rel (0) target = $region33
    $region32: #{tpu_custom_call.1} parent=1 // pred_region
      %658 = dma.done [#allocation5], 384
    $region33: #{tpu_custom_call.1} parent=1 // pred_fallthru
      _
    %659 = vsyncpa [#allocation4], 1
    %660 = vsyncpa [#allocation5], 1

</llo_original>
